<compile_context>
chip_gen: v6e
topology: v6e:2x2x1
jax: 0.10.0
libtpu: 0.0.40
codegen_flags: <defaults>
</compile_context>

<pallas_src>
import jax
import jax.numpy as jnp
from jax.experimental import pallas as pl
from jax.experimental.pallas import tpu as pltpu

EPS = 1e-5


# ----------------------------- Pallas kernel --------------------------------
def _make_fire_kernel(B, Cin, Csq, H, W):
    HW = H * W
    N = B * HW

    def kernel(x_ref, masks_ref, wsq_ref, bsq_ref, we1_ref, be1_ref,
               we3_ref, be3_ref, out_ref, col_ref):
        # Fold the batch into the lane axis once: [Cin, B*HW].
        xs = [x_ref[b] for b in range(B)]                     # each [Cin, HW]
        xw = xs[0] if B == 1 else jnp.concatenate(xs, axis=1)  # [Cin, N]

        # squeeze: 1x1 conv (+folded BN) + ReLU on the MXU (wide N = B*HW).
        x1 = jnp.maximum(
            jnp.dot(wsq_ref[...], xw, preferred_element_type=jnp.float32)
            + bsq_ref[...], 0.0)                              # [Csq, N]

        # ---- im2col into VMEM scratch, tap-major (kh, kw, ci) rows ----------
        m_left = masks_ref[0:1, :]    # w-1 >= 0
        m_right = masks_ref[1:2, :]   # w+1 <  W
        m_top = masks_ref[2:3, :]     # h-1 >= 0
        m_bot = masks_ref[3:4, :]     # h+1 <  H

        # Horizontal taps (kh = 1 middle block): 2 XLU rolls + dw masks.
        col_ref[3 * Csq:4 * Csq, :] = pltpu.roll(x1, shift=1, axis=1) * m_left
        col_ref[4 * Csq:5 * Csq, :] = x1
        col_ref[5 * Csq:6 * Csq, :] = pltpu.roll(x1, shift=N - 1, axis=1) * m_right

        # Vertical taps: one +/-W roll of the stacked [3*Csq, N] block + dh mask.
        hstack = col_ref[3 * Csq:6 * Csq, :]                  # [3*Csq, N]
        col_ref[0:3 * Csq, :] = pltpu.roll(hstack, shift=W, axis=1) * m_top
        col_ref[6 * Csq:9 * Csq, :] = pltpu.roll(hstack, shift=N - W, axis=1) * m_bot

        # expand_1x1 and expand_3x3 (+folded BN) + ReLU (two MXU matmuls).
        e1 = jnp.maximum(
            jnp.dot(we1_ref[...], x1, preferred_element_type=jnp.float32)
            + be1_ref[...], 0.0)                              # [Cin, N]
        e3 = jnp.maximum(
            jnp.dot(we3_ref[...], col_ref[...], preferred_element_type=jnp.float32)
            + be3_ref[...], 0.0)                              # [Cin, N]

        # Residual add + channel concat via lane-dense half stores per image.
        for b in range(B):
            lo, hi = b * HW, (b + 1) * HW
            out_ref[b, :Cin, :] = e1[:, lo:hi] + xs[b]
            out_ref[b, Cin:, :] = e3[:, lo:hi] + xs[b]

    return kernel


# --------------------- one-time parameter preparation -----------------------
def prepare_fire_params(p, B, H, W):
    """Fold BN (eval mode) into conv weights/biases and build border masks.

    Hoisted out of the per-call path (run once, results passed to fire_pallas).
    """
    HW = H * W
    Cin = p['w_e1'].shape[0]
    Csq = p['b_sq'].shape[0]

    def bn_scale_shift(prefix):
        s = p[f'{prefix}_gamma'] / jnp.sqrt(p[f'{prefix}_var'] + EPS)
        t = p[f'{prefix}_beta'] - p[f'{prefix}_mean'] * s
        return s, t

    s_sq, t_sq = bn_scale_shift('bn_sq')
    wsq = (p['w_sq'][:, :, 0, 0] * s_sq[:, None]).astype(jnp.float32)   # [Csq, Cin]
    bsq = ((p['b_sq'] * s_sq + t_sq)[:, None]).astype(jnp.float32)      # [Csq, 1]

    s1, t1 = bn_scale_shift('bn_e1')
    we1 = (p['w_e1'][:, :, 0, 0] * s1[:, None]).astype(jnp.float32)     # [Cin, Csq]
    be1 = ((p['b_e1'] * s1 + t1)[:, None]).astype(jnp.float32)          # [Cin, 1]

    s3, t3 = bn_scale_shift('bn_e3')
    # [Cin, Csq, 3, 3] -> [Cin, 9*Csq], columns ordered (kh, kw, ci) to match
    # the im2col row ordering in the kernel.
    we3 = (jnp.transpose(p['w_e3'], (0, 2, 3, 1)).reshape(Cin, 9 * Csq)
           * s3[:, None]).astype(jnp.float32)                           # [Cin, 9*Csq]
    be3 = ((p['b_e3'] * s3 + t3)[:, None]).astype(jnp.float32)          # [Cin, 1]

    # Border-validity masks over the batch-folded lane axis, [4, B*HW]:
    # rows = [left (w-1>=0), right (w+1<W), top (h-1>=0), bottom (h+1<H)].
    hh = jnp.repeat(jnp.arange(H), W)
    ww = jnp.tile(jnp.arange(W), H)
    m = jnp.stack([ww >= 1, ww <= W - 2, hh >= 1, hh <= H - 2],
                  axis=0).astype(jnp.float32)                           # [4, HW]
    masks = jnp.tile(m, (1, B))                                         # [4, B*HW]

    return dict(masks=masks, wsq=wsq, bsq=bsq,
                we1=we1, be1=be1, we3=we3, be3=be3)


# ------------------------------- wrapper -------------------------------------
@jax.jit
def fire_pallas(x_nchw, prep):
    B, Cin, H, W = x_nchw.shape
    HW = H * W
    N = B * HW
    Csq = prep['wsq'].shape[0]

    x3d = x_nchw.reshape(B, Cin, HW).astype(jnp.float32)   # free reshape (NCHW kept)

    weight_args = [prep['masks'], prep['wsq'], prep['bsq'],
                   prep['we1'], prep['be1'], prep['we3'], prep['be3']]

    in_specs = [pl.BlockSpec((B, Cin, HW), lambda i: (0, 0, 0))]
    in_specs += [pl.BlockSpec(tuple(a.shape), lambda i, n=a.ndim: (0,) * n)
                 for a in weight_args]

    kernel = _make_fire_kernel(B, Cin, Csq, H, W)

    out = pl.pallas_call(
        kernel,
        out_shape=jax.ShapeDtypeStruct((B, 2 * Cin, HW), jnp.float32),
        grid_spec=pltpu.PrefetchScalarGridSpec(
            num_scalar_prefetch=0,
            grid=(1,),                      # single step: batch folded into lanes
            in_specs=in_specs,
            out_specs=pl.BlockSpec((B, 2 * Cin, HW), lambda i: (0, 0, 0)),
            scratch_shapes=[pltpu.VMEM((9 * Csq, N), jnp.float32)],
        ),
        compiler_params=pltpu.CompilerParams(
            dimension_semantics=("arbitrary",),
            vmem_limit_bytes=32 * 1024 * 1024),
    )(x3d, *weight_args)

    # [B, 2*Cin, HW] -> NCHW [B, 2*Cin, H, W] (free reshape, no transpose)
    return out.reshape(B, 2 * Cin, H, W)


# --------------------------- parameters & reference --------------------------
def init_params(key, cin, reduction):
    csq = cin // reduction
    ks = jax.random.split(key, 12)

    def w(k, shape, scale=0.1):
        return scale * jax.random.normal(k, shape, jnp.float32)

    p = {
        'w_sq': w(ks[0], (csq, cin, 1, 1)), 'b_sq': w(ks[1], (csq,)),
        'w_e1': w(ks[2], (cin, csq, 1, 1)), 'b_e1': w(ks[3], (cin,)),
        'w_e3': w(ks[4], (cin, csq, 3, 3)), 'b_e3': w(ks[5], (cin,)),
    }
    for name, c, k0 in (('bn_sq', csq, 6), ('bn_e1', cin, 8), ('bn_e3', cin, 10)):
        p[f'{name}_gamma'] = 1.0 + 0.1 * jax.random.normal(ks[k0], (c,), jnp.float32)
        p[f'{name}_beta'] = 0.1 * jax.random.normal(ks[k0 + 1], (c,), jnp.float32)
        p[f'{name}_mean'] = 0.05 * jnp.arange(c, dtype=jnp.float32)
        p[f'{name}_var'] = 1.0 + 0.01 * jnp.arange(c, dtype=jnp.float32)
    return p


def ref_forward(x, p):
    # pure-JAX reference (lax convs), NCHW end-to-end, BN in eval mode.
    def conv(x, w, b, pad=0):
        y = jax.lax.conv_general_dilated(
            x, w, (1, 1), [(pad, pad), (pad, pad)],
            dimension_numbers=('NCHW', 'OIHW', 'NCHW'),
            precision=jax.lax.Precision.HIGHEST)
        return y + b.reshape(1, -1, 1, 1)

    def bn_relu(y, prefix):
        s = p[f'{prefix}_gamma'] / jnp.sqrt(p[f'{prefix}_var'] + EPS)
        t = p[f'{prefix}_beta'] - p[f'{prefix}_mean'] * s
        return jnp.maximum(y * s.reshape(1, -1, 1, 1) + t.reshape(1, -1, 1, 1), 0.0)

    x1 = bn_relu(conv(x, p['w_sq'], p['b_sq']), 'bn_sq')
    e1 = bn_relu(conv(x1, p['w_e1'], p['b_e1']), 'bn_e1')
    e3 = bn_relu(conv(x1, p['w_e3'], p['b_e3'], pad=1), 'bn_e3')
    return jnp.concatenate([e1 + x, e3 + x], axis=1)


# --------------------------------- main --------------------------------------
if __name__ == "__main__":
    key = jax.random.PRNGKey(0)
    kx, kp = jax.random.split(key)

    B, Cin, H, W = 2, 32, 16, 16
    reduction = 4
    x = jax.random.normal(kx, (B, Cin, H, W), jnp.float32)
    params = init_params(kp, Cin, reduction)

    # One-time preparation (BN folding, weight reshapes, masks) -- hot path only
    # runs the pallas_call.
    prep = jax.block_until_ready(prepare_fire_params(params, B, H, W))

    out = jax.block_until_ready(fire_pallas(x, prep))
    ref = jax.block_until_ready(ref_forward(x, params))

    assert out.shape == (B, 2 * Cin, H, W), out.shape
    err = float(jnp.max(jnp.abs(out - ref)))
    tol = 1e-4 * (1.0 + float(jnp.max(jnp.abs(ref))))
    if err > tol:
        raise AssertionError(f"mismatch vs reference: max abs err {err} (tol {tol})")
    print("KERNEL_OK")
</pallas_src>

<mosaic_0001>
module attributes {stable_mosaic.version = 11 : i64} {
  func.func @kernel(%arg0: i32, %arg1: memref<2x32x256xf32, #tpu.memory_space<vmem>>, %arg2: memref<4x512xf32, #tpu.memory_space<vmem>>, %arg3: memref<8x32xf32, #tpu.memory_space<vmem>>, %arg4: memref<8x1xf32, #tpu.memory_space<vmem>>, %arg5: memref<32x8xf32, #tpu.memory_space<vmem>>, %arg6: memref<32x1xf32, #tpu.memory_space<vmem>>, %arg7: memref<32x72xf32, #tpu.memory_space<vmem>>, %arg8: memref<32x1xf32, #tpu.memory_space<vmem>>, %arg9: memref<2x64x256xf32, #tpu.memory_space<vmem>>, %arg10: memref<72x512xf32, #tpu.memory_space<vmem>>) attributes {dimension_semantics = [#tpu.dimension_semantics<arbitrary>], iteration_bounds = array<i64: 1>, scalar_prefetch = 0 : i64, scratch_operands = 1 : i64, tpu.core_type = #tpu.core_type<tc>, window_params = [{pipeline_mode = #tpu.pipeline_mode<synchronous>, transform_indices = @transform_0, window_bounds = array<i64: 2, 32, 256>}, {pipeline_mode = #tpu.pipeline_mode<synchronous>, transform_indices = @transform_1, window_bounds = array<i64: 4, 512>}, {pipeline_mode = #tpu.pipeline_mode<synchronous>, transform_indices = @transform_2, window_bounds = array<i64: 8, 32>}, {pipeline_mode = #tpu.pipeline_mode<synchronous>, transform_indices = @transform_3, window_bounds = array<i64: 8, 1>}, {pipeline_mode = #tpu.pipeline_mode<synchronous>, transform_indices = @transform_4, window_bounds = array<i64: 32, 8>}, {pipeline_mode = #tpu.pipeline_mode<synchronous>, transform_indices = @transform_5, window_bounds = array<i64: 32, 1>}, {pipeline_mode = #tpu.pipeline_mode<synchronous>, transform_indices = @transform_6, window_bounds = array<i64: 32, 72>}, {pipeline_mode = #tpu.pipeline_mode<synchronous>, transform_indices = @transform_7, window_bounds = array<i64: 32, 1>}, {pipeline_mode = #tpu.pipeline_mode<synchronous>, transform_indices = @transform_8, window_bounds = array<i64: 2, 64, 256>}]} {
    %c0 = arith.constant 0 : index
    %c0_0 = arith.constant 0 : index
    %c0_1 = arith.constant 0 : index
    %0 = vector.load %arg1[%c0, %c0_0, %c0_1] : memref<2x32x256xf32, #tpu.memory_space<vmem>>, vector<1x32x256xf32>
    %1 = vector.shape_cast %0 : vector<1x32x256xf32> to vector<32x256xf32>
    %c1 = arith.constant 1 : index
    %c0_2 = arith.constant 0 : index
    %c0_3 = arith.constant 0 : index
    %2 = vector.load %arg1[%c1, %c0_2, %c0_3] : memref<2x32x256xf32, #tpu.memory_space<vmem>>, vector<1x32x256xf32>
    %3 = vector.shape_cast %2 : vector<1x32x256xf32> to vector<32x256xf32>
    %4 = tpu.concatenate %1, %3 in 1 : vector<32x256xf32>, vector<32x256xf32> -> vector<32x512xf32>
    %c0_4 = arith.constant 0 : index
    %c0_5 = arith.constant 0 : index
    %5 = vector.load %arg3[%c0_4, %c0_5] : memref<8x32xf32, #tpu.memory_space<vmem>>, vector<8x32xf32>
    %cst = arith.constant dense<0.000000e+00> : vector<8x512xf32>
    %6 = tpu.matmul %5, %4, %cst {dimension_numbers = #tpu.dot_dimension_numbers<[1], [0], [0], [1], [0, 0, 1, 1], [], []>} : vector<8x32xf32>, vector<32x512xf32>, vector<8x512xf32> -> vector<8x512xf32>
    %c0_6 = arith.constant 0 : index
    %c0_7 = arith.constant 0 : index
    %7 = vector.load %arg4[%c0_6, %c0_7] : memref<8x1xf32, #tpu.memory_space<vmem>>, vector<8x1xf32>
    %8 = vector.broadcast %7 : vector<8x1xf32> to vector<8x512xf32>
    %9 = arith.addf %6, %8 : vector<8x512xf32>
    %cst_8 = arith.constant 0.000000e+00 : f32
    %10 = vector.broadcast %cst_8 : f32 to vector<8x512xf32>
    %11 = arith.maximumf %9, %10 : vector<8x512xf32>
    %c0_9 = arith.constant 0 : index
    %c0_10 = arith.constant 0 : index
    %12 = vector.load %arg2[%c0_9, %c0_10] : memref<4x512xf32, #tpu.memory_space<vmem>>, vector<1x512xf32>
    %c1_11 = arith.constant 1 : index
    %c0_12 = arith.constant 0 : index
    %13 = vector.load %arg2[%c1_11, %c0_12] : memref<4x512xf32, #tpu.memory_space<vmem>>, vector<1x512xf32>
    %c2 = arith.constant 2 : index
    %c0_13 = arith.constant 0 : index
    %14 = vector.load %arg2[%c2, %c0_13] : memref<4x512xf32, #tpu.memory_space<vmem>>, vector<1x512xf32>
    %c3 = arith.constant 3 : index
    %c0_14 = arith.constant 0 : index
    %15 = vector.load %arg2[%c3, %c0_14] : memref<4x512xf32, #tpu.memory_space<vmem>>, vector<1x512xf32>
    %c1_i32 = arith.constant 1 : i32
    %16 = tpu.dynamic_rotate %11 by %c1_i32 dim 1 : vector<8x512xf32>, i32 -> vector<8x512xf32>
    %17 = vector.broadcast %12 : vector<1x512xf32> to vector<8x512xf32>
    %18 = arith.mulf %16, %17 : vector<8x512xf32>
    %c24 = arith.constant 24 : index
    %c0_15 = arith.constant 0 : index
    %19 = vector.load %arg10[%c24, %c0_15] : memref<72x512xf32, #tpu.memory_space<vmem>>, vector<8x512xf32>
    tpu.vector_store %arg10[%c24, %c0_15], %18 {strides = array<i32>} : memref<72x512xf32, #tpu.memory_space<vmem>>, vector<8x512xf32>,
    %c32 = arith.constant 32 : index
    %c0_16 = arith.constant 0 : index
    %20 = vector.load %arg10[%c32, %c0_16] : memref<72x512xf32, #tpu.memory_space<vmem>>, vector<8x512xf32>
    tpu.vector_store %arg10[%c32, %c0_16], %11 {strides = array<i32>} : memref<72x512xf32, #tpu.memory_space<vmem>>, vector<8x512xf32>,
    %c511_i32 = arith.constant 511 : i32
    %21 = tpu.dynamic_rotate %11 by %c511_i32 dim 1 : vector<8x512xf32>, i32 -> vector<8x512xf32>
    %22 = vector.broadcast %13 : vector<1x512xf32> to vector<8x512xf32>
    %23 = arith.mulf %21, %22 : vector<8x512xf32>
    %c40 = arith.constant 40 : index
    %c0_17 = arith.constant 0 : index
    %24 = vector.load %arg10[%c40, %c0_17] : memref<72x512xf32, #tpu.memory_space<vmem>>, vector<8x512xf32>
    tpu.vector_store %arg10[%c40, %c0_17], %23 {strides = array<i32>} : memref<72x512xf32, #tpu.memory_space<vmem>>, vector<8x512xf32>,
    %c24_18 = arith.constant 24 : index
    %c0_19 = arith.constant 0 : index
    %25 = vector.load %arg10[%c24_18, %c0_19] : memref<72x512xf32, #tpu.memory_space<vmem>>, vector<24x512xf32>
    %c16_i32 = arith.constant 16 : i32
    %26 = tpu.dynamic_rotate %25 by %c16_i32 dim 1 : vector<24x512xf32>, i32 -> vector<24x512xf32>
    %27 = vector.broadcast %14 : vector<1x512xf32> to vector<24x512xf32>
    %28 = arith.mulf %26, %27 : vector<24x512xf32>
    %c0_20 = arith.constant 0 : index
    %c0_21 = arith.constant 0 : index
    %29 = vector.load %arg10[%c0_20, %c0_21] : memref<72x512xf32, #tpu.memory_space<vmem>>, vector<24x512xf32>
    tpu.vector_store %arg10[%c0_20, %c0_21], %28 {strides = array<i32>} : memref<72x512xf32, #tpu.memory_space<vmem>>, vector<24x512xf32>,
    %c496_i32 = arith.constant 496 : i32
    %30 = tpu.dynamic_rotate %25 by %c496_i32 dim 1 : vector<24x512xf32>, i32 -> vector<24x512xf32>
    %31 = vector.broadcast %15 : vector<1x512xf32> to vector<24x512xf32>
    %32 = arith.mulf %30, %31 : vector<24x512xf32>
    %c48 = arith.constant 48 : index
    %c0_22 = arith.constant 0 : index
    %33 = vector.load %arg10[%c48, %c0_22] : memref<72x512xf32, #tpu.memory_space<vmem>>, vector<24x512xf32>
    tpu.vector_store %arg10[%c48, %c0_22], %32 {strides = array<i32>} : memref<72x512xf32, #tpu.memory_space<vmem>>, vector<24x512xf32>,
    %c0_23 = arith.constant 0 : index
    %c0_24 = arith.constant 0 : index
    %34 = vector.load %arg5[%c0_23, %c0_24] : memref<32x8xf32, #tpu.memory_space<vmem>>, vector<32x8xf32>
    %cst_25 = arith.constant dense<0.000000e+00> : vector<32x512xf32>
    %35 = tpu.matmul %34, %11, %cst_25 {dimension_numbers = #tpu.dot_dimension_numbers<[1], [0], [0], [1], [0, 0, 1, 1], [], []>} : vector<32x8xf32>, vector<8x512xf32>, vector<32x512xf32> -> vector<32x512xf32>
    %c0_26 = arith.constant 0 : index
    %c0_27 = arith.constant 0 : index
    %36 = vector.load %arg6[%c0_26, %c0_27] : memref<32x1xf32, #tpu.memory_space<vmem>>, vector<32x1xf32>
    %37 = vector.broadcast %36 : vector<32x1xf32> to vector<32x512xf32>
    %38 = arith.addf %35, %37 : vector<32x512xf32>
    %cst_28 = arith.constant 0.000000e+00 : f32
    %39 = vector.broadcast %cst_28 : f32 to vector<32x512xf32>
    %40 = arith.maximumf %38, %39 : vector<32x512xf32>
    %c0_29 = arith.constant 0 : index
    %c0_30 = arith.constant 0 : index
    %41 = vector.load %arg7[%c0_29, %c0_30] : memref<32x72xf32, #tpu.memory_space<vmem>>, vector<32x72xf32>
    %c0_31 = arith.constant 0 : index
    %c0_32 = arith.constant 0 : index
    %42 = vector.load %arg10[%c0_31, %c0_32] : memref<72x512xf32, #tpu.memory_space<vmem>>, vector<72x512xf32>
    %cst_33 = arith.constant dense<0.000000e+00> : vector<32x512xf32>
    %43 = tpu.matmul %41, %42, %cst_33 {dimension_numbers = #tpu.dot_dimension_numbers<[1], [0], [0], [1], [0, 0, 1, 1], [], []>} : vector<32x72xf32>, vector<72x512xf32>, vector<32x512xf32> -> vector<32x512xf32>
    %c0_34 = arith.constant 0 : index
    %c0_35 = arith.constant 0 : index
    %44 = vector.load %arg8[%c0_34, %c0_35] : memref<32x1xf32, #tpu.memory_space<vmem>>, vector<32x1xf32>
    %45 = vector.broadcast %44 : vector<32x1xf32> to vector<32x512xf32>
    %46 = arith.addf %43, %45 : vector<32x512xf32>
    %cst_36 = arith.constant 0.000000e+00 : f32
    %47 = vector.broadcast %cst_36 : f32 to vector<32x512xf32>
    %48 = arith.maximumf %46, %47 : vector<32x512xf32>
    %49 = vector.extract_strided_slice %40 {offsets = [0, 0], sizes = [32, 256], strides = [1, 1]} : vector<32x512xf32> to vector<32x256xf32>
    %50 = arith.addf %49, %1 : vector<32x256xf32>
    %c0_37 = arith.constant 0 : index
    %c0_38 = arith.constant 0 : index
    %c0_39 = arith.constant 0 : index
    %51 = vector.load %arg9[%c0_37, %c0_38, %c0_39] : memref<2x64x256xf32, #tpu.memory_space<vmem>>, vector<1x32x256xf32>
    %52 = vector.shape_cast %51 : vector<1x32x256xf32> to vector<32x256xf32>
    %53 = vector.shape_cast %50 : vector<32x256xf32> to vector<1x32x256xf32>
    tpu.vector_store %arg9[%c0_37, %c0_38, %c0_39], %53 {strides = array<i32>} : memref<2x64x256xf32, #tpu.memory_space<vmem>>, vector<1x32x256xf32>,
    %54 = vector.extract_strided_slice %48 {offsets = [0, 0], sizes = [32, 256], strides = [1, 1]} : vector<32x512xf32> to vector<32x256xf32>
    %55 = arith.addf %54, %1 : vector<32x256xf32>
    %c0_40 = arith.constant 0 : index
    %c32_41 = arith.constant 32 : index
    %c0_42 = arith.constant 0 : index
    %56 = vector.load %arg9[%c0_40, %c32_41, %c0_42] : memref<2x64x256xf32, #tpu.memory_space<vmem>>, vector<1x32x256xf32>
    %57 = vector.shape_cast %56 : vector<1x32x256xf32> to vector<32x256xf32>
    %58 = vector.shape_cast %55 : vector<32x256xf32> to vector<1x32x256xf32>
    tpu.vector_store %arg9[%c0_40, %c32_41, %c0_42], %58 {strides = array<i32>} : memref<2x64x256xf32, #tpu.memory_space<vmem>>, vector<1x32x256xf32>,
    %59 = vector.extract_strided_slice %40 {offsets = [0, 256], sizes = [32, 256], strides = [1, 1]} : vector<32x512xf32> to vector<32x256xf32>
    %60 = arith.addf %59, %3 : vector<32x256xf32>
    %c1_43 = arith.constant 1 : index
    %c0_44 = arith.constant 0 : index
    %c0_45 = arith.constant 0 : index
    %61 = vector.load %arg9[%c1_43, %c0_44, %c0_45] : memref<2x64x256xf32, #tpu.memory_space<vmem>>, vector<1x32x256xf32>
    %62 = vector.shape_cast %61 : vector<1x32x256xf32> to vector<32x256xf32>
    %63 = vector.shape_cast %60 : vector<32x256xf32> to vector<1x32x256xf32>
    tpu.vector_store %arg9[%c1_43, %c0_44, %c0_45], %63 {strides = array<i32>} : memref<2x64x256xf32, #tpu.memory_space<vmem>>, vector<1x32x256xf32>,
    %64 = vector.extract_strided_slice %48 {offsets = [0, 256], sizes = [32, 256], strides = [1, 1]} : vector<32x512xf32> to vector<32x256xf32>
    %65 = arith.addf %64, %3 : vector<32x256xf32>
    %c1_46 = arith.constant 1 : index
    %c32_47 = arith.constant 32 : index
    %c0_48 = arith.constant 0 : index
    %66 = vector.load %arg9[%c1_46, %c32_47, %c0_48] : memref<2x64x256xf32, #tpu.memory_space<vmem>>, vector<1x32x256xf32>
    %67 = vector.shape_cast %66 : vector<1x32x256xf32> to vector<32x256xf32>
    %68 = vector.shape_cast %65 : vector<32x256xf32> to vector<1x32x256xf32>
    tpu.vector_store %arg9[%c1_46, %c32_47, %c0_48], %68 {strides = array<i32>} : memref<2x64x256xf32, #tpu.memory_space<vmem>>, vector<1x32x256xf32>,
    return
  }
  func.func @transform_0(%arg0: i32) -> (i32, i32, i32) {
    %c0_i32 = arith.constant 0 : i32
    %c0_i32_0 = arith.constant 0 : i32
    %c0_i32_1 = arith.constant 0 : i32
    %c0_i32_2 = arith.constant 0 : i32
    return %c0_i32, %c0_i32_0, %c0_i32_1 : i32, i32, i32
  }
  func.func @transform_1(%arg0: i32) -> (i32, i32) {
    %c0_i32 = arith.constant 0 : i32
    %c0_i32_0 = arith.constant 0 : i32
    %c0_i32_1 = arith.constant 0 : i32
    return %c0_i32, %c0_i32_0 : i32, i32
  }
  func.func @transform_2(%arg0: i32) -> (i32, i32) {
    %c0_i32 = arith.constant 0 : i32
    %c0_i32_0 = arith.constant 0 : i32
    %c0_i32_1 = arith.constant 0 : i32
    return %c0_i32, %c0_i32_0 : i32, i32
  }
  func.func @transform_3(%arg0: i32) -> (i32, i32) {
    %c0_i32 = arith.constant 0 : i32
    %c0_i32_0 = arith.constant 0 : i32
    %c0_i32_1 = arith.constant 0 : i32
    return %c0_i32, %c0_i32_0 : i32, i32
  }
  func.func @transform_4(%arg0: i32) -> (i32, i32) {
    %c0_i32 = arith.constant 0 : i32
    %c0_i32_0 = arith.constant 0 : i32
    %c0_i32_1 = arith.constant 0 : i32
    return %c0_i32, %c0_i32_0 : i32, i32
  }
  func.func @transform_5(%arg0: i32) -> (i32, i32) {
    %c0_i32 = arith.constant 0 : i32
    %c0_i32_0 = arith.constant 0 : i32
    %c0_i32_1 = arith.constant 0 : i32
    return %c0_i32, %c0_i32_0 : i32, i32
  }
  func.func @transform_6(%arg0: i32) -> (i32, i32) {
    %c0_i32 = arith.constant 0 : i32
    %c0_i32_0 = arith.constant 0 : i32
    %c0_i32_1 = arith.constant 0 : i32
    return %c0_i32, %c0_i32_0 : i32, i32
  }
  func.func @transform_7(%arg0: i32) -> (i32, i32) {
    %c0_i32 = arith.constant 0 : i32
    %c0_i32_0 = arith.constant 0 : i32
    %c0_i32_1 = arith.constant 0 : i32
    return %c0_i32, %c0_i32_0 : i32, i32
  }
  func.func @transform_8(%arg0: i32) -> (i32, i32, i32) {
    %c0_i32 = arith.constant 0 : i32
    %c0_i32_0 = arith.constant 0 : i32
    %c0_i32_1 = arith.constant 0 : i32
    %c0_i32_2 = arith.constant 0 : i32
    return %c0_i32, %c0_i32_0, %c0_i32_1 : i32, i32, i32
  }
}

</mosaic_0001>

<llo_original>
// kernel: fire_pallas.1
$region0: #{fire_pallas.1}
  #allocation0 [shape = 'u32[]', space=smem, size = 0x4, offset = 0x4, fixed_abs, tag = 'smem constant byte address 0x4 - core index']
  #allocation1 [shape = 'u32[144,128]{1,0:T(1,128)}', space=vmem, size = 0x12000, scoped, tag = 'internal scratch']
  #allocation2 [shape = 'f32[72,512]{1,0:T(8,128)}', space=vmem, size = 0x24000, scoped, tag = 'scratch operand']
  %s0 = inlined_call_operand.vmem [shape: f32[2,32,256], index: 0, kind: input, shape index: {}]
  %s1 = inlined_call_operand.vmem [shape: f32[4,512], index: 1, kind: input, shape index: {}]
  %s2 = inlined_call_operand.vmem [shape: f32[8,32], index: 2, kind: input, shape index: {}]
  %s3 = inlined_call_operand.vmem [shape: f32[8,1], index: 3, kind: input, shape index: {}]
  %s4 = inlined_call_operand.vmem [shape: f32[32,8], index: 4, kind: input, shape index: {}]
  %s5 = inlined_call_operand.vmem [shape: f32[32,1], index: 5, kind: input, shape index: {}]
  %s6 = inlined_call_operand.vmem [shape: f32[32,72], index: 6, kind: input, shape index: {}]
  %s7 = inlined_call_operand.vmem [shape: f32[32,1], index: 7, kind: input, shape index: {}]
  %s8 = inlined_call_operand.vmem [shape: f32[2,64,256], index: 8, kind: output, shape index: {}]
  %s9 = sld [smem:[#allocation0]]
  $region42: #{fire_pallas.1} parent=0
    _
  %s11 = ssub.s32 1, %s9
  %s12 = scalar_select 0, %s11, %s9
  // Predicated region
  $region2: #{fire_pallas.1} parent=0 // pred_check
    _
  $region3: #{fire_pallas.1} parent=0 // pred_check_branch
    %14 = sbr.rel (0) target = $region5
  $region4: #{fire_pallas.1} parent=0 // pred_region
    _
  $region5: #{fire_pallas.1} parent=0 // pred_fallthru
    _
  // Predicated region
  $region6: #{fire_pallas.1} parent=0 // pred_check
    _
  $region7: #{fire_pallas.1} parent=0 // pred_check_branch
    %16 = sbr.rel (0) target = $region9
  $region8: #{fire_pallas.1} parent=0 // pred_region
    _
  $region9: #{fire_pallas.1} parent=0 // pred_fallthru
    _
  // Predicated region
  $region10: #{fire_pallas.1} parent=0 // pred_check
    _
  $region11: #{fire_pallas.1} parent=0 // pred_check_branch
    %18 = sbr.rel (0) target = $region13
  $region12: #{fire_pallas.1} parent=0 // pred_region
    _
  $region13: #{fire_pallas.1} parent=0 // pred_fallthru
    _
  // Predicated region
  $region14: #{fire_pallas.1} parent=0 // pred_check
    _
  $region15: #{fire_pallas.1} parent=0 // pred_check_branch
    %20 = sbr.rel (0) target = $region17
  $region16: #{fire_pallas.1} parent=0 // pred_region
    _
  $region17: #{fire_pallas.1} parent=0 // pred_fallthru
    _
  // Predicated region
  $region18: #{fire_pallas.1} parent=0 // pred_check
    _
  $region19: #{fire_pallas.1} parent=0 // pred_check_branch
    %22 = sbr.rel (0) target = $region21
  $region20: #{fire_pallas.1} parent=0 // pred_region
    _
  $region21: #{fire_pallas.1} parent=0 // pred_fallthru
    _
  // Predicated region
  $region22: #{fire_pallas.1} parent=0 // pred_check
    _
  $region23: #{fire_pallas.1} parent=0 // pred_check_branch
    %24 = sbr.rel (0) target = $region25
  $region24: #{fire_pallas.1} parent=0 // pred_region
    _
  $region25: #{fire_pallas.1} parent=0 // pred_fallthru
    _
  // Predicated region
  $region26: #{fire_pallas.1} parent=0 // pred_check
    _
  $region27: #{fire_pallas.1} parent=0 // pred_check_branch
    %26 = sbr.rel (0) target = $region29
  $region28: #{fire_pallas.1} parent=0 // pred_region
    _
  $region29: #{fire_pallas.1} parent=0 // pred_fallthru
    _
  // Predicated region
  $region30: #{fire_pallas.1} parent=0 // pred_check
    _
  $region31: #{fire_pallas.1} parent=0 // pred_check_branch
    %28 = sbr.rel (0) target = $region33
  $region32: #{fire_pallas.1} parent=0 // pred_region
    _
  $region33: #{fire_pallas.1} parent=0 // pred_fallthru
    _
  %v29 = vld [vmem:[%s0] sm:$0xff]
  %v30 = vld [vmem:[%s0 + $0x8] sm:$0xff]
  %v31 = vld [vmem:[%s0 + $0x10] sm:$0xff]
  %v32 = vld [vmem:[%s0 + $0x18] sm:$0xff]
  %v33 = vld [vmem:[%s0 + $0x20] sm:$0xff]
  %v34 = vld [vmem:[%s0 + $0x28] sm:$0xff]
  %v35 = vld [vmem:[%s0 + $0x30] sm:$0xff]
  %v36 = vld [vmem:[%s0 + $0x38] sm:$0xff]
  %s37 = scalar_lea.vmem %s0, 64
  %v38 = vld [vmem:[%s37] sm:$0xff]
  %v39 = vld [vmem:[%s37 + $0x8] sm:$0xff]
  %v40 = vld [vmem:[%s37 + $0x10] sm:$0xff]
  %v41 = vld [vmem:[%s37 + $0x18] sm:$0xff]
  %v42 = vld [vmem:[%s37 + $0x20] sm:$0xff]
  %v43 = vld [vmem:[%s37 + $0x28] sm:$0xff]
  %v44 = vld [vmem:[%s37 + $0x30] sm:$0xff]
  %v45 = vld [vmem:[%s37 + $0x38] sm:$0xff]
  %v46 = vld [vmem:[%s2] sm:$0xff]
  %v47 = vld [vmem:[%s3] sm:$0xff]
  %49 = vset.pattern.permute.xlu0 0
  %50 = vperm.xlu0 %49, %v47
  %v51 = vpop.permute.xlu0 %50
  %vm53 = vcmask 261120
  %v55 = vsel %vm53, %v46, 0
  %57 = vmatprep.subr.mxu0 0.0
  %58 = vmatpush1.msra.mxu0 0.0
  %59 = vmatprep.subr.mxu0 0.0
  %60 = vmatpush1.msra.mxu0 0.0
  %61 = vmatprep.subr.mxu0 0.0
  %62 = vmatpush1.msra.mxu0 0.0
  %63 = vmatprep.subr.mxu0 0.0
  %64 = vmatpush1.msra.mxu0 0.0
  %65 = vmatprep.subr.mxu0 0.0
  %66 = vmatpush1.msra.mxu0 0.0
  %67 = vmatprep.subr.mxu0 0.0
  %68 = vmatpush1.msra.mxu0 0.0
  %69 = vmatprep.subr.mxu0 0.0
  %70 = vmatpush1.msra.mxu0 0.0
  %71 = vmatprep.subr.mxu0 0.0
  %72 = vmatpush1.msra.mxu0 0.0
  %73 = vmatprep.subr.mxu0 0.0
  %74 = vmatpush1.msra.mxu0 0.0
  %75 = vmatprep.subr.mxu0 0.0
  %76 = vmatpush1.msra.mxu0 0.0
  %77 = vmatprep.subr.mxu0 0.0
  %78 = vmatpush1.msra.mxu0 0.0
  %79 = vmatprep.subr.mxu0 0.0
  %80 = vmatpush1.msra.mxu0 0.0
  %81 = vmatprep.subr.mxu0 %v36
  %82 = vmatpush1.msra.mxu0 %v35
  %83 = vmatprep.subr.mxu0 %v34
  %84 = vmatpush1.msra.mxu0 %v33
  %85 = vmatprep.subr.mxu0 %v32
  %86 = vmatpush1.msra.mxu0 %v31
  %87 = vmatprep.subr.mxu0 %v30
  %88 = vmatpush1.msra.mxu0 %v29
  %89 = vmatprep.subr.mxu0 0.0
  %90 = vmatpush2.msra.mxu0 0.0
  %91 = vmatprep.subr.mxu0 0.0
  %92 = vmatpush2.msra.mxu0 0.0
  %93 = vmatprep.subr.mxu0 0.0
  %94 = vmatpush2.msra.mxu0 0.0
  %95 = vmatprep.subr.mxu0 0.0
  %96 = vmatpush2.msra.mxu0 0.0
  %97 = vmatprep.subr.mxu0 0.0
  %98 = vmatpush2.msra.mxu0 0.0
  %99 = vmatprep.subr.mxu0 0.0
  %100 = vmatpush2.msra.mxu0 0.0
  %101 = vmatprep.subr.mxu0 0.0
  %102 = vmatpush2.msra.mxu0 0.0
  %103 = vmatprep.subr.mxu0 0.0
  %104 = vmatpush2.msra.mxu0 0.0
  %105 = vmatprep.subr.mxu0 0.0
  %106 = vmatpush2.msra.mxu0 0.0
  %107 = vmatprep.subr.mxu0 0.0
  %108 = vmatpush2.msra.mxu0 0.0
  %109 = vmatprep.subr.mxu0 0.0
  %110 = vmatpush2.msra.mxu0 0.0
  %111 = vmatprep.subr.mxu0 0.0
  %112 = vmatpush2.msra.mxu0 0.0
  %113 = vmatprep.subr.mxu0 0.0
  %114 = vmatpush2.msra.mxu0 0.0
  %115 = vmatprep.subr.mxu0 0.0
  %116 = vmatpush2.msra.mxu0 0.0
  %117 = vmatprep.subr.mxu0 0.0
  %118 = vmatpush2.msra.mxu0 0.0
  %119 = vmatprep.subr.mxu0 0.0
  %120 = vmatpush2.msra.mxu0 0.0
  %121 = vmatprep.mubr.f32.mxu0 0.0
  %122 = vmatmul.mubr.f32.gmra.mxu0 %v55
  %v123 = vpop.f32.mrf.mxu0
  %v124 = vadd.f32 %v51, %v123
  %v125 = vpop.f32.mrf.mxu0
  %v126 = vadd.f32 %v51, %v125
  %127 = vdwg.mxu0
  %128 = vmatprep.subr.mxu0 0.0
  %129 = vmatpush1.msra.mxu0 0.0
  %130 = vmatprep.subr.mxu0 0.0
  %131 = vmatpush1.msra.mxu0 0.0
  %132 = vmatprep.subr.mxu0 0.0
  %133 = vmatpush1.msra.mxu0 0.0
  %134 = vmatprep.subr.mxu0 0.0
  %135 = vmatpush1.msra.mxu0 0.0
  %136 = vmatprep.subr.mxu0 0.0
  %137 = vmatpush1.msra.mxu0 0.0
  %138 = vmatprep.subr.mxu0 0.0
  %139 = vmatpush1.msra.mxu0 0.0
  %140 = vmatprep.subr.mxu0 0.0
  %141 = vmatpush1.msra.mxu0 0.0
  %142 = vmatprep.subr.mxu0 0.0
  %143 = vmatpush1.msra.mxu0 0.0
  %144 = vmatprep.subr.mxu0 0.0
  %145 = vmatpush1.msra.mxu0 0.0
  %146 = vmatprep.subr.mxu0 0.0
  %147 = vmatpush1.msra.mxu0 0.0
  %148 = vmatprep.subr.mxu0 0.0
  %149 = vmatpush1.msra.mxu0 0.0
  %150 = vmatprep.subr.mxu0 0.0
  %151 = vmatpush1.msra.mxu0 0.0
  %152 = vmatprep.subr.mxu0 %v45
  %153 = vmatpush1.msra.mxu0 %v44
  %154 = vmatprep.subr.mxu0 %v43
  %155 = vmatpush1.msra.mxu0 %v42
  %156 = vmatprep.subr.mxu0 %v41
  %157 = vmatpush1.msra.mxu0 %v40
  %158 = vmatprep.subr.mxu0 %v39
  %159 = vmatpush1.msra.mxu0 %v38
  %160 = vmatprep.subr.mxu0 0.0
  %161 = vmatpush2.msra.mxu0 0.0
  %162 = vmatprep.subr.mxu0 0.0
  %163 = vmatpush2.msra.mxu0 0.0
  %164 = vmatprep.subr.mxu0 0.0
  %165 = vmatpush2.msra.mxu0 0.0
  %166 = vmatprep.subr.mxu0 0.0
  %167 = vmatpush2.msra.mxu0 0.0
  %168 = vmatprep.subr.mxu0 0.0
  %169 = vmatpush2.msra.mxu0 0.0
  %170 = vmatprep.subr.mxu0 0.0
  %171 = vmatpush2.msra.mxu0 0.0
  %172 = vmatprep.subr.mxu0 0.0
  %173 = vmatpush2.msra.mxu0 0.0
  %174 = vmatprep.subr.mxu0 0.0
  %175 = vmatpush2.msra.mxu0 0.0
  %176 = vmatprep.subr.mxu0 0.0
  %177 = vmatpush2.msra.mxu0 0.0
  %178 = vmatprep.subr.mxu0 0.0
  %179 = vmatpush2.msra.mxu0 0.0
  %180 = vmatprep.subr.mxu0 0.0
  %181 = vmatpush2.msra.mxu0 0.0
  %182 = vmatprep.subr.mxu0 0.0
  %183 = vmatpush2.msra.mxu0 0.0
  %184 = vmatprep.subr.mxu0 0.0
  %185 = vmatpush2.msra.mxu0 0.0
  %186 = vmatprep.subr.mxu0 0.0
  %187 = vmatpush2.msra.mxu0 0.0
  %188 = vmatprep.subr.mxu0 0.0
  %189 = vmatpush2.msra.mxu0 0.0
  %190 = vmatprep.subr.mxu0 0.0
  %191 = vmatpush2.msra.mxu0 0.0
  %192 = vmatprep.mubr.f32.mxu0 0.0
  %193 = vmatmul.mubr.f32.gmra.mxu0 %v55
  %v194 = vpop.f32.mrf.mxu0
  %v195 = vadd.f32 %v51, %v194
  %v196 = vpop.f32.mrf.mxu0
  %v197 = vadd.f32 %v51, %v196
  %198 = vdwg.mxu0
  %v199 = vmax.f32 %v124, 0.0
  %v200 = vmax.f32 %v126, 0.0
  %v201 = vmax.f32 %v195, 0.0
  %v202 = vmax.f32 %v197, 0.0
  %v203 = vld [vmem:[%s1] ss:$4 sm:$0xf]
  %s204 = scalar_lea.vmem %s1, 1
  %v205 = vld [vmem:[%s204] ss:$4 sm:$0xf]
  %s206 = scalar_lea.vmem %s1, 2
  %v207 = vld [vmem:[%s206] ss:$4 sm:$0xf]
  %s208 = scalar_lea.vmem %s1, 3
  %v209 = vld [vmem:[%s208] ss:$4 sm:$0xf]
  %210 = vrot.lane.b32.xlu0 %v199, 1
  %v211 = vpop.permute.xlu0 %210
  %212 = vrot.lane.b32.xlu0 %v200, 1
  %v213 = vpop.permute.xlu0 %212
  %214 = vrot.lane.b32.xlu0 %v201, 1
  %v215 = vpop.permute.xlu0 %214
  %216 = vrot.lane.b32.xlu0 %v202, 1
  %v217 = vpop.permute.xlu0 %216
  %v218 = vlaneseq
  %v219 = vand.u32 %v218, 127
  %vm220 = vcmp.lt.s32.totalorder %v219, 1
  %v221 = vsel %vm220, %v215, %v217
  %v222 = vsel %vm220, %v213, %v215
  %v223 = vsel %vm220, %v211, %v213
  %v224 = vsel %vm220, %v217, %v211
  %v226 = vlaneseq
  %v227 = vshrl.u32 %v226, 7
  %v228 = vsub.s32 0, %v227
  %v229 = vrot.slane %v203, %v228
  %v230 = vlaneseq
  %v231 = vshrl.u32 %v230, 7
  %v232 = vsub.s32 1, %v231
  %v233 = vrot.slane %v203, %v232
  %v234 = vlaneseq
  %v235 = vshrl.u32 %v234, 7
  %v236 = vsub.s32 2, %v235
  %v237 = vrot.slane %v203, %v236
  %v238 = vlaneseq
  %v239 = vshrl.u32 %v238, 7
  %v240 = vsub.s32 3, %v239
  %v241 = vrot.slane %v203, %v240
  %v246 = vmul.f32 %v224, %v229
  %v247 = vmul.f32 %v223, %v233
  %v248 = vmul.f32 %v222, %v237
  %v249 = vmul.f32 %v221, %v241
  %250 = vst [vmem:[#allocation2 + $0x60] sm:$0xff] %v246
  %251 = vst [vmem:[#allocation2 + $0x68] sm:$0xff] %v247
  %252 = vst [vmem:[#allocation2 + $0x70] sm:$0xff] %v248
  %253 = vst [vmem:[#allocation2 + $0x78] sm:$0xff] %v249
  %254 = vst [vmem:[#allocation2 + $0x80] sm:$0xff] %v199
  %255 = vst [vmem:[#allocation2 + $0x88] sm:$0xff] %v200
  %256 = vst [vmem:[#allocation2 + $0x90] sm:$0xff] %v201
  %257 = vst [vmem:[#allocation2 + $0x98] sm:$0xff] %v202
  %258 = vrot.lane.b32.xlu0 %v199, 127
  %v259 = vpop.permute.xlu0 %258
  %260 = vrot.lane.b32.xlu0 %v200, 127
  %v261 = vpop.permute.xlu0 %260
  %262 = vrot.lane.b32.xlu0 %v201, 127
  %v263 = vpop.permute.xlu0 %262
  %264 = vrot.lane.b32.xlu0 %v202, 127
  %v265 = vpop.permute.xlu0 %264
  %vm266 = vcmp.lt.s32.totalorder %v219, 127
  %v267 = vsel %vm266, %v263, %v265
  %v268 = vsel %vm266, %v261, %v263
  %v269 = vsel %vm266, %v259, %v261
  %v270 = vsel %vm266, %v265, %v259
  %v272 = vlaneseq
  %v273 = vshrl.u32 %v272, 7
  %v274 = vsub.s32 0, %v273
  %v275 = vrot.slane %v205, %v274
  %v276 = vlaneseq
  %v277 = vshrl.u32 %v276, 7
  %v278 = vsub.s32 1, %v277
  %v279 = vrot.slane %v205, %v278
  %v280 = vlaneseq
  %v281 = vshrl.u32 %v280, 7
  %v282 = vsub.s32 2, %v281
  %v283 = vrot.slane %v205, %v282
  %v284 = vlaneseq
  %v285 = vshrl.u32 %v284, 7
  %v286 = vsub.s32 3, %v285
  %v287 = vrot.slane %v205, %v286
  %v292 = vmul.f32 %v269, %v275
  %v293 = vmul.f32 %v268, %v279
  %v294 = vmul.f32 %v267, %v283
  %v295 = vmul.f32 %v270, %v287
  %296 = vst [vmem:[#allocation2 + $0xa0] sm:$0xff] %v292
  %297 = vst [vmem:[#allocation2 + $0xa8] sm:$0xff] %v293
  %298 = vst [vmem:[#allocation2 + $0xb0] sm:$0xff] %v294
  %299 = vst [vmem:[#allocation2 + $0xb8] sm:$0xff] %v295
  %v300 = vld [vmem:[#allocation2 + $0x60] sm:$0xff]
  %v301 = vld [vmem:[#allocation2 + $0x68] sm:$0xff]
  %v302 = vld [vmem:[#allocation2 + $0x70] sm:$0xff]
  %v303 = vld [vmem:[#allocation2 + $0x78] sm:$0xff]
  %v304 = vld [vmem:[#allocation2 + $0x80] sm:$0xff]
  %v305 = vld [vmem:[#allocation2 + $0x88] sm:$0xff]
  %v306 = vld [vmem:[#allocation2 + $0x90] sm:$0xff]
  %v307 = vld [vmem:[#allocation2 + $0x98] sm:$0xff]
  %v308 = vld [vmem:[#allocation2 + $0xa0] sm:$0xff]
  %v309 = vld [vmem:[#allocation2 + $0xa8] sm:$0xff]
  %v310 = vld [vmem:[#allocation2 + $0xb0] sm:$0xff]
  %v311 = vld [vmem:[#allocation2 + $0xb8] sm:$0xff]
  %312 = vrot.lane.b32.xlu0 %v300, 16
  %v313 = vpop.permute.xlu0 %312
  %314 = vrot.lane.b32.xlu0 %v304, 16
  %v315 = vpop.permute.xlu0 %314
  %316 = vrot.lane.b32.xlu0 %v308, 16
  %v317 = vpop.permute.xlu0 %316
  %318 = vrot.lane.b32.xlu0 %v301, 16
  %v319 = vpop.permute.xlu0 %318
  %320 = vrot.lane.b32.xlu0 %v305, 16
  %v321 = vpop.permute.xlu0 %320
  %322 = vrot.lane.b32.xlu0 %v309, 16
  %v323 = vpop.permute.xlu0 %322
  %324 = vrot.lane.b32.xlu0 %v302, 16
  %v325 = vpop.permute.xlu0 %324
  %326 = vrot.lane.b32.xlu0 %v306, 16
  %v327 = vpop.permute.xlu0 %326
  %328 = vrot.lane.b32.xlu0 %v310, 16
  %v329 = vpop.permute.xlu0 %328
  %330 = vrot.lane.b32.xlu0 %v303, 16
  %v331 = vpop.permute.xlu0 %330
  %332 = vrot.lane.b32.xlu0 %v307, 16
  %v333 = vpop.permute.xlu0 %332
  %334 = vrot.lane.b32.xlu0 %v311, 16
  %v335 = vpop.permute.xlu0 %334
  %vm336 = vcmp.lt.s32.totalorder %v219, 16
  %v337 = vsel %vm336, %v325, %v331
  %v338 = vsel %vm336, %v327, %v333
  %v339 = vsel %vm336, %v329, %v335
  %v340 = vsel %vm336, %v319, %v325
  %v341 = vsel %vm336, %v321, %v327
  %v342 = vsel %vm336, %v323, %v329
  %v343 = vsel %vm336, %v313, %v319
  %v344 = vsel %vm336, %v315, %v321
  %v345 = vsel %vm336, %v317, %v323
  %v346 = vsel %vm336, %v331, %v313
  %v347 = vsel %vm336, %v333, %v315
  %v348 = vsel %vm336, %v335, %v317
  %v350 = vlaneseq
  %v351 = vshrl.u32 %v350, 7
  %v352 = vsub.s32 0, %v351
  %v353 = vrot.slane %v207, %v352
  %v354 = vlaneseq
  %v355 = vshrl.u32 %v354, 7
  %v356 = vsub.s32 1, %v355
  %v357 = vrot.slane %v207, %v356
  %v358 = vlaneseq
  %v359 = vshrl.u32 %v358, 7
  %v360 = vsub.s32 2, %v359
  %v361 = vrot.slane %v207, %v360
  %v362 = vlaneseq
  %v363 = vshrl.u32 %v362, 7
  %v364 = vsub.s32 3, %v363
  %v365 = vrot.slane %v207, %v364
  %v370 = vmul.f32 %v346, %v353
  %v371 = vmul.f32 %v343, %v357
  %v372 = vmul.f32 %v340, %v361
  %v373 = vmul.f32 %v337, %v365
  %v374 = vmul.f32 %v347, %v353
  %v375 = vmul.f32 %v344, %v357
  %v376 = vmul.f32 %v341, %v361
  %v377 = vmul.f32 %v338, %v365
  %v378 = vmul.f32 %v348, %v353
  %v379 = vmul.f32 %v345, %v357
  %v380 = vmul.f32 %v342, %v361
  %v381 = vmul.f32 %v339, %v365
  %382 = vst [vmem:[#allocation2] sm:$0xff] %v370
  %383 = vst [vmem:[#allocation2 + $0x8] sm:$0xff] %v371
  %384 = vst [vmem:[#allocation2 + $0x10] sm:$0xff] %v372
  %385 = vst [vmem:[#allocation2 + $0x18] sm:$0xff] %v373
  %386 = vst [vmem:[#allocation2 + $0x20] sm:$0xff] %v374
  %387 = vst [vmem:[#allocation2 + $0x28] sm:$0xff] %v375
  %388 = vst [vmem:[#allocation2 + $0x30] sm:$0xff] %v376
  %389 = vst [vmem:[#allocation2 + $0x38] sm:$0xff] %v377
  %390 = vst [vmem:[#allocation2 + $0x40] sm:$0xff] %v378
  %391 = vst [vmem:[#allocation2 + $0x48] sm:$0xff] %v379
  %392 = vst [vmem:[#allocation2 + $0x50] sm:$0xff] %v380
  %393 = vst [vmem:[#allocation2 + $0x58] sm:$0xff] %v381
  %394 = vrot.lane.b32.xlu0 %v300, 112
  %v395 = vpop.permute.xlu0 %394
  %396 = vrot.lane.b32.xlu0 %v304, 112
  %v397 = vpop.permute.xlu0 %396
  %398 = vrot.lane.b32.xlu0 %v308, 112
  %v399 = vpop.permute.xlu0 %398
  %400 = vrot.lane.b32.xlu0 %v301, 112
  %v401 = vpop.permute.xlu0 %400
  %402 = vrot.lane.b32.xlu0 %v305, 112
  %v403 = vpop.permute.xlu0 %402
  %404 = vrot.lane.b32.xlu0 %v309, 112
  %v405 = vpop.permute.xlu0 %404
  %406 = vrot.lane.b32.xlu0 %v302, 112
  %v407 = vpop.permute.xlu0 %406
  %408 = vrot.lane.b32.xlu0 %v306, 112
  %v409 = vpop.permute.xlu0 %408
  %410 = vrot.lane.b32.xlu0 %v310, 112
  %v411 = vpop.permute.xlu0 %410
  %412 = vrot.lane.b32.xlu0 %v303, 112
  %v413 = vpop.permute.xlu0 %412
  %414 = vrot.lane.b32.xlu0 %v307, 112
  %v415 = vpop.permute.xlu0 %414
  %416 = vrot.lane.b32.xlu0 %v311, 112
  %v417 = vpop.permute.xlu0 %416
  %vm418 = vcmp.lt.s32.totalorder %v219, 112
  %v419 = vsel %vm418, %v407, %v413
  %v420 = vsel %vm418, %v409, %v415
  %v421 = vsel %vm418, %v411, %v417
  %v422 = vsel %vm418, %v401, %v407
  %v423 = vsel %vm418, %v403, %v409
  %v424 = vsel %vm418, %v405, %v411
  %v425 = vsel %vm418, %v395, %v401
  %v426 = vsel %vm418, %v397, %v403
  %v427 = vsel %vm418, %v399, %v405
  %v428 = vsel %vm418, %v413, %v395
  %v429 = vsel %vm418, %v415, %v397
  %v430 = vsel %vm418, %v417, %v399
  %v432 = vlaneseq
  %v433 = vshrl.u32 %v432, 7
  %v434 = vsub.s32 0, %v433
  %v435 = vrot.slane %v209, %v434
  %v436 = vlaneseq
  %v437 = vshrl.u32 %v436, 7
  %v438 = vsub.s32 1, %v437
  %v439 = vrot.slane %v209, %v438
  %v440 = vlaneseq
  %v441 = vshrl.u32 %v440, 7
  %v442 = vsub.s32 2, %v441
  %v443 = vrot.slane %v209, %v442
  %v444 = vlaneseq
  %v445 = vshrl.u32 %v444, 7
  %v446 = vsub.s32 3, %v445
  %v447 = vrot.slane %v209, %v446
  %v452 = vmul.f32 %v425, %v435
  %v453 = vmul.f32 %v422, %v439
  %v454 = vmul.f32 %v419, %v443
  %v455 = vmul.f32 %v428, %v447
  %v456 = vmul.f32 %v426, %v435
  %v457 = vmul.f32 %v423, %v439
  %v458 = vmul.f32 %v420, %v443
  %v459 = vmul.f32 %v429, %v447
  %v460 = vmul.f32 %v427, %v435
  %v461 = vmul.f32 %v424, %v439
  %v462 = vmul.f32 %v421, %v443
  %v463 = vmul.f32 %v430, %v447
  %464 = vst [vmem:[#allocation2 + $0xc0] sm:$0xff] %v452
  %465 = vst [vmem:[#allocation2 + $0xc8] sm:$0xff] %v453
  %466 = vst [vmem:[#allocation2 + $0xd0] sm:$0xff] %v454
  %467 = vst [vmem:[#allocation2 + $0xd8] sm:$0xff] %v455
  %468 = vst [vmem:[#allocation2 + $0xe0] sm:$0xff] %v456
  %469 = vst [vmem:[#allocation2 + $0xe8] sm:$0xff] %v457
  %470 = vst [vmem:[#allocation2 + $0xf0] sm:$0xff] %v458
  %471 = vst [vmem:[#allocation2 + $0xf8] sm:$0xff] %v459
  %472 = vst [vmem:[#allocation2 + $0x100] sm:$0xff] %v460
  %473 = vst [vmem:[#allocation2 + $0x108] sm:$0xff] %v461
  %474 = vst [vmem:[#allocation2 + $0x110] sm:$0xff] %v462
  %475 = vst [vmem:[#allocation2 + $0x118] sm:$0xff] %v463
  %v476 = vld [vmem:[%s4] sm:$0xff]
  %v477 = vld [vmem:[%s4 + $0x8] sm:$0xff]
  %v478 = vld [vmem:[%s4 + $0x10] sm:$0xff]
  %v479 = vld [vmem:[%s4 + $0x18] sm:$0xff]
  %v480 = vld [vmem:[%s5] sm:$0xff]
  %v481 = vld [vmem:[%s5 + $0x8] sm:$0xff]
  %v482 = vld [vmem:[%s5 + $0x10] sm:$0xff]
  %v483 = vld [vmem:[%s5 + $0x18] sm:$0xff]
  %485 = vset.pattern.permute.xlu0 0
  %486 = vperm.xlu0 %485, %v480
  %v487 = vpop.permute.xlu0 %486
  %490 = vset.pattern.permute.xlu0 0
  %491 = vperm.xlu0 %490, %v481
  %v492 = vpop.permute.xlu0 %491
  %495 = vset.pattern.permute.xlu0 0
  %496 = vperm.xlu0 %495, %v482
  %v497 = vpop.permute.xlu0 %496
  %500 = vset.pattern.permute.xlu0 0
  %501 = vperm.xlu0 %500, %v483
  %v502 = vpop.permute.xlu0 %501
  %vm504 = vcmask 64512
  %v506 = vsel %vm504, %v476, 0
  %v509 = vsel %vm504, %v477, 0
  %v512 = vsel %vm504, %v478, 0
  %v515 = vsel %vm504, %v479, 0
  %517 = vmatprep.subr.mxu0 0.0
  %518 = vmatpush1.msra.mxu0 0.0
  %519 = vmatprep.subr.mxu0 0.0
  %520 = vmatpush1.msra.mxu0 0.0
  %521 = vmatprep.subr.mxu0 0.0
  %522 = vmatpush1.msra.mxu0 0.0
  %523 = vmatprep.subr.mxu0 0.0
  %524 = vmatpush1.msra.mxu0 0.0
  %525 = vmatprep.subr.mxu0 0.0
  %526 = vmatpush1.msra.mxu0 0.0
  %527 = vmatprep.subr.mxu0 0.0
  %528 = vmatpush1.msra.mxu0 0.0
  %529 = vmatprep.subr.mxu0 0.0
  %530 = vmatpush1.msra.mxu0 0.0
  %531 = vmatprep.subr.mxu0 0.0
  %532 = vmatpush1.msra.mxu0 0.0
  %533 = vmatprep.subr.mxu0 0.0
  %534 = vmatpush1.msra.mxu0 0.0
  %535 = vmatprep.subr.mxu0 0.0
  %536 = vmatpush1.msra.mxu0 0.0
  %537 = vmatprep.subr.mxu0 0.0
  %538 = vmatpush1.msra.mxu0 0.0
  %539 = vmatprep.subr.mxu0 0.0
  %540 = vmatpush1.msra.mxu0 0.0
  %541 = vmatprep.subr.mxu0 0.0
  %542 = vmatpush1.msra.mxu0 0.0
  %543 = vmatprep.subr.mxu0 0.0
  %544 = vmatpush1.msra.mxu0 0.0
  %545 = vmatprep.subr.mxu0 0.0
  %546 = vmatpush1.msra.mxu0 0.0
  %547 = vmatprep.subr.mxu0 %v200
  %548 = vmatpush1.msra.mxu0 %v199
  %549 = vmatprep.subr.mxu0 0.0
  %550 = vmatpush2.msra.mxu0 0.0
  %551 = vmatprep.subr.mxu0 0.0
  %552 = vmatpush2.msra.mxu0 0.0
  %553 = vmatprep.subr.mxu0 0.0
  %554 = vmatpush2.msra.mxu0 0.0
  %555 = vmatprep.subr.mxu0 0.0
  %556 = vmatpush2.msra.mxu0 0.0
  %557 = vmatprep.subr.mxu0 0.0
  %558 = vmatpush2.msra.mxu0 0.0
  %559 = vmatprep.subr.mxu0 0.0
  %560 = vmatpush2.msra.mxu0 0.0
  %561 = vmatprep.subr.mxu0 0.0
  %562 = vmatpush2.msra.mxu0 0.0
  %563 = vmatprep.subr.mxu0 0.0
  %564 = vmatpush2.msra.mxu0 0.0
  %565 = vmatprep.subr.mxu0 0.0
  %566 = vmatpush2.msra.mxu0 0.0
  %567 = vmatprep.subr.mxu0 0.0
  %568 = vmatpush2.msra.mxu0 0.0
  %569 = vmatprep.subr.mxu0 0.0
  %570 = vmatpush2.msra.mxu0 0.0
  %571 = vmatprep.subr.mxu0 0.0
  %572 = vmatpush2.msra.mxu0 0.0
  %573 = vmatprep.subr.mxu0 0.0
  %574 = vmatpush2.msra.mxu0 0.0
  %575 = vmatprep.subr.mxu0 0.0
  %576 = vmatpush2.msra.mxu0 0.0
  %577 = vmatprep.subr.mxu0 0.0
  %578 = vmatpush2.msra.mxu0 0.0
  %579 = vmatprep.subr.mxu0 0.0
  %580 = vmatpush2.msra.mxu0 0.0
  %581 = vmatprep.mubr.f32.mxu0 0.0
  %582 = vmatmul.mubr.f32.gmra.mxu0 %v506
  %v583 = vpop.f32.mrf.mxu0
  %v584 = vadd.f32 %v487, %v583
  %v585 = vpop.f32.mrf.mxu0
  %v586 = vadd.f32 %v487, %v585
  %587 = vmatprep.mubr.f32.mxu0 0.0
  %588 = vmatmul.mubr.f32.gmra.mxu0 %v509
  %v589 = vpop.f32.mrf.mxu0
  %v590 = vadd.f32 %v492, %v589
  %v591 = vpop.f32.mrf.mxu0
  %v592 = vadd.f32 %v492, %v591
  %593 = vmatprep.mubr.f32.mxu0 0.0
  %594 = vmatmul.mubr.f32.gmra.mxu0 %v512
  %v595 = vpop.f32.mrf.mxu0
  %v596 = vadd.f32 %v497, %v595
  %v597 = vpop.f32.mrf.mxu0
  %v598 = vadd.f32 %v497, %v597
  %599 = vmatprep.mubr.f32.mxu0 0.0
  %600 = vmatmul.mubr.f32.gmra.mxu0 %v515
  %v601 = vpop.f32.mrf.mxu0
  %v602 = vadd.f32 %v502, %v601
  %v603 = vpop.f32.mrf.mxu0
  %v604 = vadd.f32 %v502, %v603
  %605 = vdwg.mxu0
  %606 = vmatprep.subr.mxu0 0.0
  %607 = vmatpush1.msra.mxu0 0.0
  %608 = vmatprep.subr.mxu0 0.0
  %609 = vmatpush1.msra.mxu0 0.0
  %610 = vmatprep.subr.mxu0 0.0
  %611 = vmatpush1.msra.mxu0 0.0
  %612 = vmatprep.subr.mxu0 0.0
  %613 = vmatpush1.msra.mxu0 0.0
  %614 = vmatprep.subr.mxu0 0.0
  %615 = vmatpush1.msra.mxu0 0.0
  %616 = vmatprep.subr.mxu0 0.0
  %617 = vmatpush1.msra.mxu0 0.0
  %618 = vmatprep.subr.mxu0 0.0
  %619 = vmatpush1.msra.mxu0 0.0
  %620 = vmatprep.subr.mxu0 0.0
  %621 = vmatpush1.msra.mxu0 0.0
  %622 = vmatprep.subr.mxu0 0.0
  %623 = vmatpush1.msra.mxu0 0.0
  %624 = vmatprep.subr.mxu0 0.0
  %625 = vmatpush1.msra.mxu0 0.0
  %626 = vmatprep.subr.mxu0 0.0
  %627 = vmatpush1.msra.mxu0 0.0
  %628 = vmatprep.subr.mxu0 0.0
  %629 = vmatpush1.msra.mxu0 0.0
  %630 = vmatprep.subr.mxu0 0.0
  %631 = vmatpush1.msra.mxu0 0.0
  %632 = vmatprep.subr.mxu0 0.0
  %633 = vmatpush1.msra.mxu0 0.0
  %634 = vmatprep.subr.mxu0 0.0
  %635 = vmatpush1.msra.mxu0 0.0
  %636 = vmatprep.subr.mxu0 %v202
  %637 = vmatpush1.msra.mxu0 %v201
  %638 = vmatprep.subr.mxu0 0.0
  %639 = vmatpush2.msra.mxu0 0.0
  %640 = vmatprep.subr.mxu0 0.0
  %641 = vmatpush2.msra.mxu0 0.0
  %642 = vmatprep.subr.mxu0 0.0
  %643 = vmatpush2.msra.mxu0 0.0
  %644 = vmatprep.subr.mxu0 0.0
  %645 = vmatpush2.msra.mxu0 0.0
  %646 = vmatprep.subr.mxu0 0.0
  %647 = vmatpush2.msra.mxu0 0.0
  %648 = vmatprep.subr.mxu0 0.0
  %649 = vmatpush2.msra.mxu0 0.0
  %650 = vmatprep.subr.mxu0 0.0
  %651 = vmatpush2.msra.mxu0 0.0
  %652 = vmatprep.subr.mxu0 0.0
  %653 = vmatpush2.msra.mxu0 0.0
  %654 = vmatprep.subr.mxu0 0.0
  %655 = vmatpush2.msra.mxu0 0.0
  %656 = vmatprep.subr.mxu0 0.0
  %657 = vmatpush2.msra.mxu0 0.0
  %658 = vmatprep.subr.mxu0 0.0
  %659 = vmatpush2.msra.mxu0 0.0
  %660 = vmatprep.subr.mxu0 0.0
  %661 = vmatpush2.msra.mxu0 0.0
  %662 = vmatprep.subr.mxu0 0.0
  %663 = vmatpush2.msra.mxu0 0.0
  %664 = vmatprep.subr.mxu0 0.0
  %665 = vmatpush2.msra.mxu0 0.0
  %666 = vmatprep.subr.mxu0 0.0
  %667 = vmatpush2.msra.mxu0 0.0
  %668 = vmatprep.subr.mxu0 0.0
  %669 = vmatpush2.msra.mxu0 0.0
  %670 = vmatprep.mubr.f32.mxu0 0.0
  %671 = vmatmul.mubr.f32.gmra.mxu0 %v506
  %v672 = vpop.f32.mrf.mxu0
  %v673 = vadd.f32 %v487, %v672
  %v674 = vpop.f32.mrf.mxu0
  %v675 = vadd.f32 %v487, %v674
  %676 = vmatprep.mubr.f32.mxu0 0.0
  %677 = vmatmul.mubr.f32.gmra.mxu0 %v509
  %v678 = vpop.f32.mrf.mxu0
  %v679 = vadd.f32 %v492, %v678
  %v680 = vpop.f32.mrf.mxu0
  %v681 = vadd.f32 %v492, %v680
  %682 = vmatprep.mubr.f32.mxu0 0.0
  %683 = vmatmul.mubr.f32.gmra.mxu0 %v512
  %v684 = vpop.f32.mrf.mxu0
  %v685 = vadd.f32 %v497, %v684
  %v686 = vpop.f32.mrf.mxu0
  %v687 = vadd.f32 %v497, %v686
  %688 = vmatprep.mubr.f32.mxu0 0.0
  %689 = vmatmul.mubr.f32.gmra.mxu0 %v515
  %v690 = vpop.f32.mrf.mxu0
  %v691 = vadd.f32 %v502, %v690
  %v692 = vpop.f32.mrf.mxu0
  %v693 = vadd.f32 %v502, %v692
  %694 = vdwg.mxu0
  %v695 = vmax.f32 %v584, 0.0
  %v696 = vmax.f32 %v586, 0.0
  %v697 = vmax.f32 %v673, 0.0
  %v698 = vmax.f32 %v675, 0.0
  %v699 = vmax.f32 %v590, 0.0
  %v700 = vmax.f32 %v592, 0.0
  %v701 = vmax.f32 %v679, 0.0
  %v702 = vmax.f32 %v681, 0.0
  %v703 = vmax.f32 %v596, 0.0
  %v704 = vmax.f32 %v598, 0.0
  %v705 = vmax.f32 %v685, 0.0
  %v706 = vmax.f32 %v687, 0.0
  %v707 = vmax.f32 %v602, 0.0
  %v708 = vmax.f32 %v604, 0.0
  %v709 = vmax.f32 %v691, 0.0
  %v710 = vmax.f32 %v693, 0.0
  %v711 = vld [vmem:[%s6] sm:$0xff]
  %v712 = vld [vmem:[%s6 + $0x8] sm:$0xff]
  %v713 = vld [vmem:[%s6 + $0x10] sm:$0xff]
  %v714 = vld [vmem:[%s6 + $0x18] sm:$0xff]
  %v715 = vld [vmem:[#allocation2] sm:$0xff]
  %v716 = vld [vmem:[#allocation2 + $0x8] sm:$0xff]
  %v717 = vld [vmem:[#allocation2 + $0x10] sm:$0xff]
  %v718 = vld [vmem:[#allocation2 + $0x18] sm:$0xff]
  %v719 = vld [vmem:[#allocation2 + $0x20] sm:$0xff]
  %v720 = vld [vmem:[#allocation2 + $0x28] sm:$0xff]
  %v721 = vld [vmem:[#allocation2 + $0x30] sm:$0xff]
  %v722 = vld [vmem:[#allocation2 + $0x38] sm:$0xff]
  %v723 = vld [vmem:[#allocation2 + $0x40] sm:$0xff]
  %v724 = vld [vmem:[#allocation2 + $0x48] sm:$0xff]
  %v725 = vld [vmem:[#allocation2 + $0x50] sm:$0xff]
  %v726 = vld [vmem:[#allocation2 + $0x58] sm:$0xff]
  %v727 = vld [vmem:[#allocation2 + $0x60] sm:$0xff]
  %v728 = vld [vmem:[#allocation2 + $0x68] sm:$0xff]
  %v729 = vld [vmem:[#allocation2 + $0x70] sm:$0xff]
  %v730 = vld [vmem:[#allocation2 + $0x78] sm:$0xff]
  %v731 = vld [vmem:[#allocation2 + $0x80] sm:$0xff]
  %v732 = vld [vmem:[#allocation2 + $0x88] sm:$0xff]
  %v733 = vld [vmem:[#allocation2 + $0x90] sm:$0xff]
  %v734 = vld [vmem:[#allocation2 + $0x98] sm:$0xff]
  %v735 = vld [vmem:[#allocation2 + $0xa0] sm:$0xff]
  %v736 = vld [vmem:[#allocation2 + $0xa8] sm:$0xff]
  %v737 = vld [vmem:[#allocation2 + $0xb0] sm:$0xff]
  %v738 = vld [vmem:[#allocation2 + $0xb8] sm:$0xff]
  %v739 = vld [vmem:[#allocation2 + $0xc0] sm:$0xff]
  %v740 = vld [vmem:[#allocation2 + $0xc8] sm:$0xff]
  %v741 = vld [vmem:[#allocation2 + $0xd0] sm:$0xff]
  %v742 = vld [vmem:[#allocation2 + $0xd8] sm:$0xff]
  %v743 = vld [vmem:[#allocation2 + $0xe0] sm:$0xff]
  %v744 = vld [vmem:[#allocation2 + $0xe8] sm:$0xff]
  %v745 = vld [vmem:[#allocation2 + $0xf0] sm:$0xff]
  %v746 = vld [vmem:[#allocation2 + $0xf8] sm:$0xff]
  %v747 = vld [vmem:[#allocation2 + $0x100] sm:$0xff]
  %v748 = vld [vmem:[#allocation2 + $0x108] sm:$0xff]
  %v749 = vld [vmem:[#allocation2 + $0x110] sm:$0xff]
  %v750 = vld [vmem:[#allocation2 + $0x118] sm:$0xff]
  %v751 = vld [vmem:[%s7] sm:$0xff]
  %v752 = vld [vmem:[%s7 + $0x8] sm:$0xff]
  %v753 = vld [vmem:[%s7 + $0x10] sm:$0xff]
  %v754 = vld [vmem:[%s7 + $0x18] sm:$0xff]
  %756 = vset.pattern.permute.xlu0 0
  %757 = vperm.xlu0 %756, %v751
  %v758 = vpop.permute.xlu0 %757
  %761 = vset.pattern.permute.xlu0 0
  %762 = vperm.xlu0 %761, %v752
  %v763 = vpop.permute.xlu0 %762
  %766 = vset.pattern.permute.xlu0 0
  %767 = vperm.xlu0 %766, %v753
  %v768 = vpop.permute.xlu0 %767
  %771 = vset.pattern.permute.xlu0 0
  %772 = vperm.xlu0 %771, %v754
  %v773 = vpop.permute.xlu0 %772
  %vm775 = vcmask 588800
  %v777 = vsel %vm775, %v711, 0
  %v780 = vsel %vm775, %v712, 0
  %v783 = vsel %vm775, %v713, 0
  %v786 = vsel %vm775, %v714, 0
  %788 = vmatprep.subr.mxu0 0.0
  %789 = vmatpush1.msra.mxu0 0.0
  %790 = vmatprep.subr.mxu0 0.0
  %791 = vmatpush1.msra.mxu0 0.0
  %792 = vmatprep.subr.mxu0 0.0
  %793 = vmatpush1.msra.mxu0 0.0
  %794 = vmatprep.subr.mxu0 0.0
  %795 = vmatpush1.msra.mxu0 0.0
  %796 = vmatprep.subr.mxu0 0.0
  %797 = vmatpush1.msra.mxu0 0.0
  %798 = vmatprep.subr.mxu0 0.0
  %799 = vmatpush1.msra.mxu0 0.0
  %800 = vmatprep.subr.mxu0 0.0
  %801 = vmatpush1.msra.mxu0 0.0
  %802 = vmatprep.subr.mxu0 %v748
  %803 = vmatpush1.msra.mxu0 %v747
  %804 = vmatprep.subr.mxu0 %v744
  %805 = vmatpush1.msra.mxu0 %v743
  %806 = vmatprep.subr.mxu0 %v740
  %807 = vmatpush1.msra.mxu0 %v739
  %808 = vmatprep.subr.mxu0 %v736
  %809 = vmatpush1.msra.mxu0 %v735
  %810 = vmatprep.subr.mxu0 %v732
  %811 = vmatpush1.msra.mxu0 %v731
  %812 = vmatprep.subr.mxu0 %v728
  %813 = vmatpush1.msra.mxu0 %v727
  %814 = vmatprep.subr.mxu0 %v724
  %815 = vmatpush1.msra.mxu0 %v723
  %816 = vmatprep.subr.mxu0 %v720
  %817 = vmatpush1.msra.mxu0 %v719
  %818 = vmatprep.subr.mxu0 %v716
  %819 = vmatpush1.msra.mxu0 %v715
  %820 = vmatprep.subr.mxu0 0.0
  %821 = vmatpush2.msra.mxu0 0.0
  %822 = vmatprep.subr.mxu0 0.0
  %823 = vmatpush2.msra.mxu0 0.0
  %824 = vmatprep.subr.mxu0 0.0
  %825 = vmatpush2.msra.mxu0 0.0
  %826 = vmatprep.subr.mxu0 0.0
  %827 = vmatpush2.msra.mxu0 0.0
  %828 = vmatprep.subr.mxu0 0.0
  %829 = vmatpush2.msra.mxu0 0.0
  %830 = vmatprep.subr.mxu0 0.0
  %831 = vmatpush2.msra.mxu0 0.0
  %832 = vmatprep.subr.mxu0 0.0
  %833 = vmatpush2.msra.mxu0 0.0
  %834 = vmatprep.subr.mxu0 0.0
  %835 = vmatpush2.msra.mxu0 0.0
  %836 = vmatprep.subr.mxu0 0.0
  %837 = vmatpush2.msra.mxu0 0.0
  %838 = vmatprep.subr.mxu0 0.0
  %839 = vmatpush2.msra.mxu0 0.0
  %840 = vmatprep.subr.mxu0 0.0
  %841 = vmatpush2.msra.mxu0 0.0
  %842 = vmatprep.subr.mxu0 0.0
  %843 = vmatpush2.msra.mxu0 0.0
  %844 = vmatprep.subr.mxu0 0.0
  %845 = vmatpush2.msra.mxu0 0.0
  %846 = vmatprep.subr.mxu0 0.0
  %847 = vmatpush2.msra.mxu0 0.0
  %848 = vmatprep.subr.mxu0 0.0
  %849 = vmatpush2.msra.mxu0 0.0
  %850 = vmatprep.subr.mxu0 0.0
  %851 = vmatpush2.msra.mxu0 0.0
  %852 = vmatprep.mubr.f32.mxu0 0.0
  %853 = vmatmul.mubr.f32.gmra.mxu0 %v777
  %v854 = vpop.f32.mrf.mxu0
  %v855 = vadd.f32 %v758, %v854
  %v856 = vpop.f32.mrf.mxu0
  %v857 = vadd.f32 %v758, %v856
  %858 = vmatprep.mubr.f32.mxu0 0.0
  %859 = vmatmul.mubr.f32.gmra.mxu0 %v780
  %v860 = vpop.f32.mrf.mxu0
  %v861 = vadd.f32 %v763, %v860
  %v862 = vpop.f32.mrf.mxu0
  %v863 = vadd.f32 %v763, %v862
  %864 = vmatprep.mubr.f32.mxu0 0.0
  %865 = vmatmul.mubr.f32.gmra.mxu0 %v783
  %v866 = vpop.f32.mrf.mxu0
  %v867 = vadd.f32 %v768, %v866
  %v868 = vpop.f32.mrf.mxu0
  %v869 = vadd.f32 %v768, %v868
  %870 = vmatprep.mubr.f32.mxu0 0.0
  %871 = vmatmul.mubr.f32.gmra.mxu0 %v786
  %v872 = vpop.f32.mrf.mxu0
  %v873 = vadd.f32 %v773, %v872
  %v874 = vpop.f32.mrf.mxu0
  %v875 = vadd.f32 %v773, %v874
  %876 = vdwg.mxu0
  %877 = vmatprep.subr.mxu0 0.0
  %878 = vmatpush1.msra.mxu0 0.0
  %879 = vmatprep.subr.mxu0 0.0
  %880 = vmatpush1.msra.mxu0 0.0
  %881 = vmatprep.subr.mxu0 0.0
  %882 = vmatpush1.msra.mxu0 0.0
  %883 = vmatprep.subr.mxu0 0.0
  %884 = vmatpush1.msra.mxu0 0.0
  %885 = vmatprep.subr.mxu0 0.0
  %886 = vmatpush1.msra.mxu0 0.0
  %887 = vmatprep.subr.mxu0 0.0
  %888 = vmatpush1.msra.mxu0 0.0
  %889 = vmatprep.subr.mxu0 0.0
  %890 = vmatpush1.msra.mxu0 0.0
  %891 = vmatprep.subr.mxu0 %v750
  %892 = vmatpush1.msra.mxu0 %v749
  %893 = vmatprep.subr.mxu0 %v746
  %894 = vmatpush1.msra.mxu0 %v745
  %895 = vmatprep.subr.mxu0 %v742
  %896 = vmatpush1.msra.mxu0 %v741
  %897 = vmatprep.subr.mxu0 %v738
  %898 = vmatpush1.msra.mxu0 %v737
  %899 = vmatprep.subr.mxu0 %v734
  %900 = vmatpush1.msra.mxu0 %v733
  %901 = vmatprep.subr.mxu0 %v730
  %902 = vmatpush1.msra.mxu0 %v729
  %903 = vmatprep.subr.mxu0 %v726
  %904 = vmatpush1.msra.mxu0 %v725
  %905 = vmatprep.subr.mxu0 %v722
  %906 = vmatpush1.msra.mxu0 %v721
  %907 = vmatprep.subr.mxu0 %v718
  %908 = vmatpush1.msra.mxu0 %v717
  %909 = vmatprep.subr.mxu0 0.0
  %910 = vmatpush2.msra.mxu0 0.0
  %911 = vmatprep.subr.mxu0 0.0
  %912 = vmatpush2.msra.mxu0 0.0
  %913 = vmatprep.subr.mxu0 0.0
  %914 = vmatpush2.msra.mxu0 0.0
  %915 = vmatprep.subr.mxu0 0.0
  %916 = vmatpush2.msra.mxu0 0.0
  %917 = vmatprep.subr.mxu0 0.0
  %918 = vmatpush2.msra.mxu0 0.0
  %919 = vmatprep.subr.mxu0 0.0
  %920 = vmatpush2.msra.mxu0 0.0
  %921 = vmatprep.subr.mxu0 0.0
  %922 = vmatpush2.msra.mxu0 0.0
  %923 = vmatprep.subr.mxu0 0.0
  %924 = vmatpush2.msra.mxu0 0.0
  %925 = vmatprep.subr.mxu0 0.0
  %926 = vmatpush2.msra.mxu0 0.0
  %927 = vmatprep.subr.mxu0 0.0
  %928 = vmatpush2.msra.mxu0 0.0
  %929 = vmatprep.subr.mxu0 0.0
  %930 = vmatpush2.msra.mxu0 0.0
  %931 = vmatprep.subr.mxu0 0.0
  %932 = vmatpush2.msra.mxu0 0.0
  %933 = vmatprep.subr.mxu0 0.0
  %934 = vmatpush2.msra.mxu0 0.0
  %935 = vmatprep.subr.mxu0 0.0
  %936 = vmatpush2.msra.mxu0 0.0
  %937 = vmatprep.subr.mxu0 0.0
  %938 = vmatpush2.msra.mxu0 0.0
  %939 = vmatprep.subr.mxu0 0.0
  %940 = vmatpush2.msra.mxu0 0.0
  %941 = vmatprep.mubr.f32.mxu0 0.0
  %942 = vmatmul.mubr.f32.gmra.mxu0 %v777
  %v943 = vpop.f32.mrf.mxu0
  %v944 = vadd.f32 %v758, %v943
  %v945 = vpop.f32.mrf.mxu0
  %v946 = vadd.f32 %v758, %v945
  %947 = vmatprep.mubr.f32.mxu0 0.0
  %948 = vmatmul.mubr.f32.gmra.mxu0 %v780
  %v949 = vpop.f32.mrf.mxu0
  %v950 = vadd.f32 %v763, %v949
  %v951 = vpop.f32.mrf.mxu0
  %v952 = vadd.f32 %v763, %v951
  %953 = vmatprep.mubr.f32.mxu0 0.0
  %954 = vmatmul.mubr.f32.gmra.mxu0 %v783
  %v955 = vpop.f32.mrf.mxu0
  %v956 = vadd.f32 %v768, %v955
  %v957 = vpop.f32.mrf.mxu0
  %v958 = vadd.f32 %v768, %v957
  %959 = vmatprep.mubr.f32.mxu0 0.0
  %960 = vmatmul.mubr.f32.gmra.mxu0 %v786
  %v961 = vpop.f32.mrf.mxu0
  %v962 = vadd.f32 %v773, %v961
  %v963 = vpop.f32.mrf.mxu0
  %v964 = vadd.f32 %v773, %v963
  %965 = vdwg.mxu0
  %v966 = vmax.f32 %v855, 0.0
  %v967 = vmax.f32 %v857, 0.0
  %v968 = vmax.f32 %v944, 0.0
  %v969 = vmax.f32 %v946, 0.0
  %v970 = vmax.f32 %v861, 0.0
  %v971 = vmax.f32 %v863, 0.0
  %v972 = vmax.f32 %v950, 0.0
  %v973 = vmax.f32 %v952, 0.0
  %v974 = vmax.f32 %v867, 0.0
  %v975 = vmax.f32 %v869, 0.0
  %v976 = vmax.f32 %v956, 0.0
  %v977 = vmax.f32 %v958, 0.0
  %v978 = vmax.f32 %v873, 0.0
  %v979 = vmax.f32 %v875, 0.0
  %v980 = vmax.f32 %v962, 0.0
  %v981 = vmax.f32 %v964, 0.0
  %v982 = vadd.f32 %v695, %v29
  %v983 = vadd.f32 %v696, %v30
  %v984 = vadd.f32 %v699, %v31
  %v985 = vadd.f32 %v700, %v32
  %v986 = vadd.f32 %v703, %v33
  %v987 = vadd.f32 %v704, %v34
  %v988 = vadd.f32 %v707, %v35
  %v989 = vadd.f32 %v708, %v36
  %990 = vst [vmem:[%s8] sm:$0xff] %v982
  %991 = vst [vmem:[%s8 + $0x8] sm:$0xff] %v983
  %992 = vst [vmem:[%s8 + $0x10] sm:$0xff] %v984
  %993 = vst [vmem:[%s8 + $0x18] sm:$0xff] %v985
  %994 = vst [vmem:[%s8 + $0x20] sm:$0xff] %v986
  %995 = vst [vmem:[%s8 + $0x28] sm:$0xff] %v987
  %996 = vst [vmem:[%s8 + $0x30] sm:$0xff] %v988
  %997 = vst [vmem:[%s8 + $0x38] sm:$0xff] %v989
  %v998 = vadd.f32 %v966, %v29
  %v999 = vadd.f32 %v967, %v30
  %v1000 = vadd.f32 %v970, %v31
  %v1001 = vadd.f32 %v971, %v32
  %v1002 = vadd.f32 %v974, %v33
  %v1003 = vadd.f32 %v975, %v34
  %v1004 = vadd.f32 %v978, %v35
  %v1005 = vadd.f32 %v979, %v36
  %1006 = vst [vmem:[%s8 + $0x40] sm:$0xff] %v998
  %1007 = vst [vmem:[%s8 + $0x48] sm:$0xff] %v999
  %1008 = vst [vmem:[%s8 + $0x50] sm:$0xff] %v1000
  %1009 = vst [vmem:[%s8 + $0x58] sm:$0xff] %v1001
  %1010 = vst [vmem:[%s8 + $0x60] sm:$0xff] %v1002
  %1011 = vst [vmem:[%s8 + $0x68] sm:$0xff] %v1003
  %1012 = vst [vmem:[%s8 + $0x70] sm:$0xff] %v1004
  %1013 = vst [vmem:[%s8 + $0x78] sm:$0xff] %v1005
  %v1014 = vadd.f32 %v697, %v38
  %v1015 = vadd.f32 %v698, %v39
  %v1016 = vadd.f32 %v701, %v40
  %v1017 = vadd.f32 %v702, %v41
  %v1018 = vadd.f32 %v705, %v42
  %v1019 = vadd.f32 %v706, %v43
  %v1020 = vadd.f32 %v709, %v44
  %v1021 = vadd.f32 %v710, %v45
  %s1022 = scalar_lea.vmem %s8, 128
  %1023 = vst [vmem:[%s1022] sm:$0xff] %v1014
  %1024 = vst [vmem:[%s1022 + $0x8] sm:$0xff] %v1015
  %1025 = vst [vmem:[%s1022 + $0x10] sm:$0xff] %v1016
  %1026 = vst [vmem:[%s1022 + $0x18] sm:$0xff] %v1017
  %1027 = vst [vmem:[%s1022 + $0x20] sm:$0xff] %v1018
  %1028 = vst [vmem:[%s1022 + $0x28] sm:$0xff] %v1019
  %1029 = vst [vmem:[%s1022 + $0x30] sm:$0xff] %v1020
  %1030 = vst [vmem:[%s1022 + $0x38] sm:$0xff] %v1021
  %v1031 = vadd.f32 %v968, %v38
  %v1032 = vadd.f32 %v969, %v39
  %v1033 = vadd.f32 %v972, %v40
  %v1034 = vadd.f32 %v973, %v41
  %v1035 = vadd.f32 %v976, %v42
  %v1036 = vadd.f32 %v977, %v43
  %v1037 = vadd.f32 %v980, %v44
  %v1038 = vadd.f32 %v981, %v45
  %1039 = vst [vmem:[%s1022 + $0x40] sm:$0xff] %v1031
  %1040 = vst [vmem:[%s1022 + $0x48] sm:$0xff] %v1032
  %1041 = vst [vmem:[%s1022 + $0x50] sm:$0xff] %v1033
  %1042 = vst [vmem:[%s1022 + $0x58] sm:$0xff] %v1034
  %1043 = vst [vmem:[%s1022 + $0x60] sm:$0xff] %v1035
  %1044 = vst [vmem:[%s1022 + $0x68] sm:$0xff] %v1036
  %1045 = vst [vmem:[%s1022 + $0x70] sm:$0xff] %v1037
  %1046 = vst [vmem:[%s1022 + $0x78] sm:$0xff] %v1038
  // Predicated region
  $region34: #{fire_pallas.1} parent=0 // pred_check
    _
  $region35: #{fire_pallas.1} parent=0 // pred_check_branch
    %1048 = sbr.rel (0) target = $region37
  $region36: #{fire_pallas.1} parent=0 // pred_region
    _
  $region37: #{fire_pallas.1} parent=0 // pred_fallthru
    _
  // Predicated region
  $region38: #{fire_pallas.1} parent=0 // pred_check
    _
  $region39: #{fire_pallas.1} parent=0 // pred_check_branch
    %1050 = sbr.rel (0) target = $region41
  $region40: #{fire_pallas.1} parent=0 // pred_region
    _
  $region41: #{fire_pallas.1} parent=0 // pred_fallthru
    _

</llo_original>
